<compile_context>
chip_gen: v6e
topology: v6e:2x2x1
jax: 0.10.0
libtpu: 0.0.40
codegen_flags: <defaults>
</compile_context>

<pallas_src>
import functools

import jax
import jax.numpy as jnp
from jax.experimental import pallas as pl
from jax.experimental.pallas import tpu as pltpu


def _ce_triplet_kernel(pred_ref, lab_col_ref, lab_row_ref, emb_ref, out_ref,
                       *, alpha, beta, margin):
    B, C = pred_ref.shape
    D = emb_ref.shape[1]

    # Cast on the VMEM load (free VPU work) instead of in the wrapper, so
    # bf16/f16 callers do not pay for an f32 HBM copy before the kernel.
    logits = pred_ref[...].astype(jnp.float32)            # (B, C)
    lab_col = lab_col_ref[...]                            # (B, 1) int32
    lab_row = lab_row_ref[...]                            # (1, B) int32

    # ---------------- Cross entropy (mean reduction) ----------------
    m = jnp.max(logits, axis=1, keepdims=True)                               # (B, 1)
    lse = m + jnp.log(jnp.sum(jnp.exp(logits - m), axis=1, keepdims=True))   # (B, 1)
    cls_iota = jax.lax.broadcasted_iota(jnp.int32, (B, C), 1)
    onehot = cls_iota == lab_col                                             # (B, C)
    picked = jnp.sum(jnp.where(onehot, logits, 0.0), axis=1, keepdims=True)  # (B, 1)
    ce = jnp.sum(lse - picked) * (1.0 / B)

    # ------------- L2 normalize (F.normalize, dim=1, eps=1e-12) -------------
    emb = emb_ref[...].astype(jnp.float32)                                   # (B, D)
    sumsq = jnp.sum(emb * emb, axis=1, keepdims=True)                        # (B, 1)
    # max(norm, 1e-12) == sqrt(max(sumsq, 1e-24)); rsqrt lands in the EUP slot.
    inv = jax.lax.rsqrt(jnp.maximum(sumsq, 1e-24))                           # (B, 1)
    e = emb * inv                                                            # (B, D)

    # ---------------- Pairwise Euclidean distances ----------------
    # bf16 MXU feed with f32 accumulation: one native MXU pass instead of the
    # multi-pass f32 emulation.  Elementwise math stays f32.
    e_b = e.astype(jnp.bfloat16)
    dot = jax.lax.dot_general(e_b, e_b, (((1,), (1,)), ((), ())),
                              preferred_element_type=jnp.float32)            # (B, B)

    # Squared norms of the normalized rows, taken from the O(B*D) path
    # (no (B,B) masked select / sublane reduce of the Gram matrix).
    sq_col = sumsq * (inv * inv)                                             # (B, 1)
    # (1, B) orientation via a tiny ones @ (e*e) matvec on the MXU; avoids a
    # (B,1)->(1,B) relayout and any (B,B) axis-0 reduction.
    sq_row = jax.lax.dot_general(jnp.ones((1, D), jnp.float32), e * e,
                                 (((1,), (1,)), ((), ())),
                                 preferred_element_type=jnp.float32)         # (1, B)

    row_i = jax.lax.broadcasted_iota(jnp.int32, (B, B), 0)
    col_i = jax.lax.broadcasted_iota(jnp.int32, (B, B), 1)
    off_diag = row_i != col_i

    d2 = jnp.maximum(sq_col - 2.0 * dot + sq_row, 0.0)                       # (B, B)
    d2 = jnp.where(off_diag, d2, 0.0)          # exact 0 on the diagonal
    is_zero = d2 == 0.0
    dist = jnp.where(is_zero, 0.0, jnp.sqrt(jnp.where(is_zero, 1e-16, d2)))  # (B, B)

    # ---------------- Batch-hard triplet mining ----------------
    same = lab_col == lab_row                                                # (B, B) bool
    pos_ok = jnp.logical_and(same, off_diag)
    hardest_pos = jnp.max(jnp.where(pos_ok, dist, 0.0), axis=1, keepdims=True)   # (B, 1)
    max_dist = jnp.max(dist, axis=1, keepdims=True)                              # (B, 1)
    # Keep the max_dist offset (not +inf) so a row with no negatives behaves
    # exactly like the reference implementation.
    anchor_neg = jnp.where(same, dist + max_dist, dist)
    hardest_neg = jnp.min(anchor_neg, axis=1, keepdims=True)                     # (B, 1)

    tl = jnp.maximum(hardest_pos - hardest_neg + margin, 0.0)
    tri = jnp.sum(tl) * (1.0 / B)

    ce_loss = alpha * ce
    tri_loss = beta * tri
    out_ref[0] = ce_loss + tri_loss
    out_ref[1] = ce_loss
    out_ref[2] = tri_loss


def ce_triplet_mg(pred_class, labels, mg_embedding, alpha=0.5, beta=0.5, margin=1.0):
    B, C = pred_class.shape
    D = mg_embedding.shape[1]
    lab_col = labels.astype(jnp.int32).reshape(B, 1)
    lab_row = labels.astype(jnp.int32).reshape(1, B)
    kernel = functools.partial(_ce_triplet_kernel,
                               alpha=float(alpha), beta=float(beta), margin=float(margin))
    cost = pl.CostEstimate(
        flops=int(2 * B * B * D + 10 * B * B + 4 * B * C + 6 * B * D),
        transcendentals=int(B * C + B * B + 2 * B),
        bytes_accessed=int(pred_class.size * pred_class.dtype.itemsize
                           + mg_embedding.size * mg_embedding.dtype.itemsize
                           + 2 * B * 4 + 3 * 4),
    )
    out = pl.pallas_call(
        kernel,
        out_shape=jax.ShapeDtypeStruct((3,), jnp.float32),
        in_specs=[pl.BlockSpec(memory_space=pltpu.MemorySpace.VMEM)] * 4,
        out_specs=pl.BlockSpec(memory_space=pltpu.MemorySpace.SMEM),
        cost_estimate=cost,
    )(pred_class, lab_col, lab_row, mg_embedding)   # native dtypes, no wrapper cast
    return out[0], out[1], out[2]


def _reference(pred_class, labels, mg_embedding, alpha=0.5, beta=0.5, margin=1.0):
    # Pure-JAX f32 mirror of the PyTorch module for a sanity check.
    logits = pred_class.astype(jnp.float32)
    lse = jax.nn.logsumexp(logits, axis=1)
    picked = jnp.take_along_axis(logits, labels[:, None].astype(jnp.int32), axis=1)[:, 0]
    ce = jnp.mean(lse - picked)

    emb = mg_embedding.astype(jnp.float32)
    e = emb / jnp.maximum(jnp.linalg.norm(emb, axis=1, keepdims=True), 1e-12)
    dot = e @ e.T
    sq = jnp.diag(dot)
    d2 = jnp.maximum(sq[:, None] - 2.0 * dot + sq[None, :], 0.0)
    zero = (d2 == 0.0).astype(jnp.float32)
    dist = jnp.sqrt(d2 + zero * 1e-16) * (1.0 - zero)

    same = labels[:, None] == labels[None, :]
    eye = jnp.eye(labels.shape[0], dtype=bool)
    pos_mask = (same & ~eye).astype(jnp.float32)
    neg_mask = (~same).astype(jnp.float32)
    hp = jnp.max(pos_mask * dist, axis=1)
    md = jnp.max(dist, axis=1)
    hn = jnp.min(dist + md[:, None] * (1.0 - neg_mask), axis=1)
    tri = jnp.mean(jnp.maximum(hp - hn + margin, 0.0))

    ce_l = alpha * ce
    tri_l = beta * tri
    return ce_l + tri_l, ce_l, tri_l


if __name__ == "__main__":
    key = jax.random.PRNGKey(0)
    k1, k2, k3 = jax.random.split(key, 3)

    B, C, D = 8, 4, 32
    pred_class = jax.random.normal(k1, (B, C), dtype=jnp.float32)
    labels = jax.random.randint(k2, (B,), 0, C, dtype=jnp.int32)
    mg_embedding = jax.random.normal(k3, (B, D), dtype=jnp.float32)

    total, ce_loss, tri_loss = ce_triplet_mg(pred_class, labels, mg_embedding,
                                             alpha=0.5, beta=0.5, margin=1.0)
    jax.block_until_ready((total, ce_loss, tri_loss))

    ref_total, ref_ce, ref_tri = _reference(pred_class, labels, mg_embedding)
    # Tolerance accounts for the bf16 MXU feed of unit-normalized embeddings.
    assert jnp.allclose(total, ref_total, atol=5e-3, rtol=5e-3)
    assert jnp.allclose(ce_loss, ref_ce, atol=5e-3, rtol=5e-3)
    assert jnp.allclose(tri_loss, ref_tri, atol=5e-3, rtol=5e-3)

    print("KERNEL_OK")
</pallas_src>

<mosaic_0001>
module attributes {stable_mosaic.version = 11 : i64} {
  func.func @_ce_triplet_kernel(%arg0: memref<8x4xf32, #tpu.memory_space<vmem>>, %arg1: memref<8x1xi32, #tpu.memory_space<vmem>>, %arg2: memref<1x8xi32, #tpu.memory_space<vmem>>, %arg3: memref<8x32xf32, #tpu.memory_space<vmem>>, %arg4: memref<3xf32, #tpu.memory_space<smem>>) attributes {dimension_semantics = [], scalar_prefetch = 0 : i64, scratch_operands = 0 : i64, tpu.core_type = #tpu.core_type<tc>} {
    %c0 = arith.constant 0 : index
    %c0_0 = arith.constant 0 : index
    %0 = vector.load %arg0[%c0, %c0_0] : memref<8x4xf32, #tpu.memory_space<vmem>>, vector<8x4xf32>
    %c0_1 = arith.constant 0 : index
    %c0_2 = arith.constant 0 : index
    %1 = vector.load %arg1[%c0_1, %c0_2] : memref<8x1xi32, #tpu.memory_space<vmem>>, vector<8x1xi32>
    %c0_3 = arith.constant 0 : index
    %c0_4 = arith.constant 0 : index
    %2 = vector.load %arg2[%c0_3, %c0_4] : memref<1x8xi32, #tpu.memory_space<vmem>>, vector<1x8xi32>
    %cst = arith.constant dense<0xFF800000> : vector<8xf32>
    %3 = vector.multi_reduction <maximumf>, %0, %cst [1] : vector<8x4xf32> to vector<8xf32>
    %4 = vector.shape_cast %3 : vector<8xf32> to vector<8x1xf32>
    %5 = vector.broadcast %4 : vector<8x1xf32> to vector<8x4xf32>
    %6 = arith.subf %0, %5 : vector<8x4xf32>
    %7 = math.exp %6 : vector<8x4xf32>
    %cst_5 = arith.constant dense<0.000000e+00> : vector<8xf32>
    %8 = vector.multi_reduction <add>, %7, %cst_5 [1] : vector<8x4xf32> to vector<8xf32>
    %9 = vector.shape_cast %8 : vector<8xf32> to vector<8x1xf32>
    %10 = math.log %9 : vector<8x1xf32>
    %11 = arith.addf %4, %10 : vector<8x1xf32>
    %12 = tpu.iota {dimensions = array<i32: 1>} : vector<8x4xi32>
    %13 = vector.broadcast %1 : vector<8x1xi32> to vector<8x4xi32>
    %14 = arith.cmpi eq, %12, %13 : vector<8x4xi32>
    %cst_6 = arith.constant 0.000000e+00 : f32
    %15 = vector.broadcast %cst_6 : f32 to vector<8x4xf32>
    %16 = arith.select %14, %0, %15 : vector<8x4xi1>, vector<8x4xf32>
    %cst_7 = arith.constant dense<0.000000e+00> : vector<8xf32>
    %17 = vector.multi_reduction <add>, %16, %cst_7 [1] : vector<8x4xf32> to vector<8xf32>
    %18 = vector.shape_cast %17 : vector<8xf32> to vector<8x1xf32>
    %19 = arith.subf %11, %18 : vector<8x1xf32>
    %20 = vector.shape_cast %19 : vector<8x1xf32> to vector<1x8x1xf32>
    %cst_8 = arith.constant dense<0.000000e+00> : vector<1xf32>
    %21 = vector.multi_reduction <add>, %20, %cst_8 [1, 2] : vector<1x8x1xf32> to vector<1xf32>
    %22 = vector.shape_cast %21 : vector<1xf32> to vector<1x1x1xf32>
    %23 = vector.extract %22[0, 0, 0] : f32 from vector<1x1x1xf32>
    %cst_9 = arith.constant 1.250000e-01 : f32
    %24 = arith.mulf %23, %cst_9 : f32
    %c0_10 = arith.constant 0 : index
    %c0_11 = arith.constant 0 : index
    %25 = vector.load %arg3[%c0_10, %c0_11] : memref<8x32xf32, #tpu.memory_space<vmem>>, vector<8x32xf32>
    %26 = arith.mulf %25, %25 : vector<8x32xf32>
    %cst_12 = arith.constant dense<0.000000e+00> : vector<8xf32>
    %27 = vector.multi_reduction <add>, %26, %cst_12 [1] : vector<8x32xf32> to vector<8xf32>
    %28 = vector.shape_cast %27 : vector<8xf32> to vector<8x1xf32>
    %cst_13 = arith.constant 1.000000e-24 : f32
    %29 = vector.broadcast %cst_13 : f32 to vector<8x1xf32>
    %30 = arith.maximumf %28, %29 : vector<8x1xf32>
    %31 = math.rsqrt %30 : vector<8x1xf32>
    %32 = vector.broadcast %31 : vector<8x1xf32> to vector<8x32xf32>
    %33 = arith.mulf %25, %32 : vector<8x32xf32>
    %34 = arith.truncf %33 : vector<8x32xf32> to vector<8x32xbf16>
    %cst_14 = arith.constant dense<0.000000e+00> : vector<8x8xf32>
    %35 = tpu.matmul %34, %34, %cst_14 {dimension_numbers = #tpu.dot_dimension_numbers<[1], [1], [0], [0], [0, 0, 1, 0], [], []>} : vector<8x32xbf16>, vector<8x32xbf16>, vector<8x8xf32> -> vector<8x8xf32>
    %36 = arith.mulf %31, %31 : vector<8x1xf32>
    %37 = arith.mulf %28, %36 : vector<8x1xf32>
    %cst_15 = arith.constant 1.000000e+00 : f32
    %38 = vector.broadcast %cst_15 : f32 to vector<1x32xf32>
    %39 = arith.mulf %33, %33 : vector<8x32xf32>
    %cst_16 = arith.constant dense<0.000000e+00> : vector<1x8xf32>
    %40 = tpu.matmul %38, %39, %cst_16 {dimension_numbers = #tpu.dot_dimension_numbers<[1], [1], [0], [0], [0, 0, 1, 0], [], []>} : vector<1x32xf32>, vector<8x32xf32>, vector<1x8xf32> -> vector<1x8xf32>
    %41 = tpu.iota {dimensions = array<i32: 0>} : vector<8x8xi32>
    %42 = tpu.iota {dimensions = array<i32: 1>} : vector<8x8xi32>
    %43 = arith.cmpi ne, %41, %42 : vector<8x8xi32>
    %cst_17 = arith.constant 2.000000e+00 : f32
    %44 = vector.broadcast %cst_17 : f32 to vector<8x8xf32>
    %45 = arith.mulf %44, %35 : vector<8x8xf32>
    %46 = vector.broadcast %37 : vector<8x1xf32> to vector<8x8xf32>
    %47 = arith.subf %46, %45 : vector<8x8xf32>
    %48 = vector.broadcast %40 : vector<1x8xf32> to vector<8x8xf32>
    %49 = arith.addf %47, %48 : vector<8x8xf32>
    %cst_18 = arith.constant 0.000000e+00 : f32
    %50 = vector.broadcast %cst_18 : f32 to vector<8x8xf32>
    %51 = arith.maximumf %49, %50 : vector<8x8xf32>
    %cst_19 = arith.constant 0.000000e+00 : f32
    %52 = vector.broadcast %cst_19 : f32 to vector<8x8xf32>
    %53 = arith.select %43, %51, %52 : vector<8x8xi1>, vector<8x8xf32>
    %cst_20 = arith.constant 0.000000e+00 : f32
    %54 = vector.broadcast %cst_20 : f32 to vector<8x8xf32>
    %55 = arith.cmpf oeq, %53, %54 : vector<8x8xf32>
    %cst_21 = arith.constant 1.000000e-16 : f32
    %56 = vector.broadcast %cst_21 : f32 to vector<8x8xf32>
    %57 = arith.select %55, %56, %53 : vector<8x8xi1>, vector<8x8xf32>
    %58 = math.sqrt %57 : vector<8x8xf32>
    %cst_22 = arith.constant 0.000000e+00 : f32
    %59 = vector.broadcast %cst_22 : f32 to vector<8x8xf32>
    %60 = arith.select %55, %59, %58 : vector<8x8xi1>, vector<8x8xf32>
    %61 = vector.broadcast %1 : vector<8x1xi32> to vector<8x8xi32>
    %62 = vector.broadcast %2 : vector<1x8xi32> to vector<8x8xi32>
    %63 = arith.cmpi eq, %61, %62 : vector<8x8xi32>
    %64 = arith.andi %63, %43 : vector<8x8xi1>
    %cst_23 = arith.constant 0.000000e+00 : f32
    %65 = vector.broadcast %cst_23 : f32 to vector<8x8xf32>
    %66 = arith.select %64, %60, %65 : vector<8x8xi1>, vector<8x8xf32>
    %cst_24 = arith.constant dense<0xFF800000> : vector<8xf32>
    %67 = vector.multi_reduction <maximumf>, %66, %cst_24 [1] : vector<8x8xf32> to vector<8xf32>
    %68 = vector.shape_cast %67 : vector<8xf32> to vector<8x1xf32>
    %cst_25 = arith.constant dense<0xFF800000> : vector<8xf32>
    %69 = vector.multi_reduction <maximumf>, %60, %cst_25 [1] : vector<8x8xf32> to vector<8xf32>
    %70 = vector.shape_cast %69 : vector<8xf32> to vector<8x1xf32>
    %71 = vector.broadcast %70 : vector<8x1xf32> to vector<8x8xf32>
    %72 = arith.addf %60, %71 : vector<8x8xf32>
    %73 = arith.select %63, %72, %60 : vector<8x8xi1>, vector<8x8xf32>
    %cst_26 = arith.constant dense<0x7F800000> : vector<8xf32>
    %74 = vector.multi_reduction <minimumf>, %73, %cst_26 [1] : vector<8x8xf32> to vector<8xf32>
    %75 = vector.shape_cast %74 : vector<8xf32> to vector<8x1xf32>
    %76 = arith.subf %68, %75 : vector<8x1xf32>
    %cst_27 = arith.constant 1.000000e+00 : f32
    %77 = vector.broadcast %cst_27 : f32 to vector<8x1xf32>
    %78 = arith.addf %76, %77 : vector<8x1xf32>
    %cst_28 = arith.constant 0.000000e+00 : f32
    %79 = vector.broadcast %cst_28 : f32 to vector<8x1xf32>
    %80 = arith.maximumf %78, %79 : vector<8x1xf32>
    %81 = vector.shape_cast %80 : vector<8x1xf32> to vector<1x8x1xf32>
    %cst_29 = arith.constant dense<0.000000e+00> : vector<1xf32>
    %82 = vector.multi_reduction <add>, %81, %cst_29 [1, 2] : vector<1x8x1xf32> to vector<1xf32>
    %83 = vector.shape_cast %82 : vector<1xf32> to vector<1x1x1xf32>
    %84 = vector.extract %83[0, 0, 0] : f32 from vector<1x1x1xf32>
    %cst_30 = arith.constant 1.250000e-01 : f32
    %85 = arith.mulf %84, %cst_30 : f32
    %cst_31 = arith.constant 5.000000e-01 : f32
    %86 = arith.mulf %cst_31, %24 : f32
    %cst_32 = arith.constant 5.000000e-01 : f32
    %87 = arith.mulf %cst_32, %85 : f32
    %88 = arith.addf %86, %87 : f32
    %c0_33 = arith.constant 0 : index
    %89 = memref.load %arg4[%c0_33] : memref<3xf32, #tpu.memory_space<smem>>
    memref.store %88, %arg4[%c0_33] : memref<3xf32, #tpu.memory_space<smem>>
    %c1 = arith.constant 1 : index
    %90 = memref.load %arg4[%c1] : memref<3xf32, #tpu.memory_space<smem>>
    memref.store %86, %arg4[%c1] : memref<3xf32, #tpu.memory_space<smem>>
    %c2 = arith.constant 2 : index
    %91 = memref.load %arg4[%c2] : memref<3xf32, #tpu.memory_space<smem>>
    memref.store %87, %arg4[%c2] : memref<3xf32, #tpu.memory_space<smem>>
    return
  }
}

</mosaic_0001>

<llo_original>
// kernel: tpu_custom_call.1
$region0: #{tpu_custom_call.1}
  #allocation0 [shape = 'u32[]', space=smem, size = 0x4, offset = 0x4, fixed_abs, tag = 'smem constant byte address 0x4 - core index']
  #allocation1 [shape = 'u32[144,128]{1,0:T(1,128)}', space=vmem, size = 0x12000, scoped, tag = 'internal scratch']
  %s0 = inlined_call_operand.vmem [shape: f32[8,4], index: 0, kind: input, shape index: {}]
  %s1 = inlined_call_operand.vmem [shape: s32[8,1], index: 1, kind: input, shape index: {}]
  %s2 = inlined_call_operand.vmem [shape: s32[1,8], index: 2, kind: input, shape index: {}]
  %s3 = inlined_call_operand.vmem [shape: f32[8,32], index: 3, kind: input, shape index: {}]
  %s4 = inlined_call_operand.hbm [shape: f32[3], index: 4, kind: output, shape index: {}]
  %s5 = sld [smem:[#allocation0]]
  $region26: #{tpu_custom_call.1} parent=0
    _
  %s7 = ssub.s32 1, %s5
  %s8 = scalar_select 0, %s7, %s5
  $region1: #{tpu_custom_call.1} parent=0
    #allocation2 [shape = 'u8[512]{0}', space=smem, size = 0x200, scoped, tag = 'output window, operand 0, single buffered']
    #allocation3 [shape = 's32[1]{0}', space=sflag, size = 0x4, scoped, tag = 'scoped memory for tpu_custom_call.1']
    %9 = vsyncpa [#allocation3], 0
    // Predicated region
    $region2: #{tpu_custom_call.1} parent=1 // pred_check
      _
    $region3: #{tpu_custom_call.1} parent=1 // pred_check_branch
      %11 = sbr.rel (0) target = $region5
    $region4: #{tpu_custom_call.1} parent=1 // pred_region
      _
    $region5: #{tpu_custom_call.1} parent=1 // pred_fallthru
      _
    // Predicated region
    $region6: #{tpu_custom_call.1} parent=1 // pred_check
      _
    $region7: #{tpu_custom_call.1} parent=1 // pred_check_branch
      %13 = sbr.rel (0) target = $region9
    $region8: #{tpu_custom_call.1} parent=1 // pred_region
      _
    $region9: #{tpu_custom_call.1} parent=1 // pred_fallthru
      _
    // Predicated region
    $region10: #{tpu_custom_call.1} parent=1 // pred_check
      _
    $region11: #{tpu_custom_call.1} parent=1 // pred_check_branch
      %15 = sbr.rel (0) target = $region13
    $region12: #{tpu_custom_call.1} parent=1 // pred_region
      _
    $region13: #{tpu_custom_call.1} parent=1 // pred_fallthru
      _
    // Predicated region
    $region14: #{tpu_custom_call.1} parent=1 // pred_check
      _
    $region15: #{tpu_custom_call.1} parent=1 // pred_check_branch
      %17 = sbr.rel (0) target = $region17
    $region16: #{tpu_custom_call.1} parent=1 // pred_region
      _
    $region17: #{tpu_custom_call.1} parent=1 // pred_fallthru
      _
    %v19 = vld [vmem:[%s0] sm:$0xff]
    %v20 = vld [vmem:[%s1] sm:$0xff]
    %v21 = vld [vmem:[%s2] sm:$0x1]
    %vm22 = vcmask 31744
    %v23 = vsel %vm22, %v19, -inf
    %24 = vmax.xlane.f32.xlu0 %v23
    %v25 = vpop.xlane.xlu0 %24
    %v26 = vsub.f32 %v19, %v25
    %v27 = vmul.f32 %v26, 1.442695
    %v28 = vpow.pop %v27
    %v29 = vsel %vm22, %v28, 0.0
    %30 = vadd.xlane.f32.xlu0 %v29
    %v31 = vpop.xlane.xlu0 %30
    %v32 = vlog2.pop %v31
    %v33 = vmul.f32 %v32, 0.6931472
    %v34 = vadd.f32 %v25, %v33
    %v35 = vlaneseq
    %v36 = vand.u32 %v35, 127
    %37 = vset.pattern.permute.xlu0 0
    %38 = vperm.xlu0 %37, %v20
    %v39 = vpop.permute.xlu0 %38
    %vm40 = vcmp.eq.s32.totalorder %v36, %v39
    %v41 = vsel %vm40, %v19, 0.0
    %v42 = vsel %vm22, %v41, 0.0
    %43 = vadd.xlane.f32.xlu0 %v42
    %v44 = vpop.xlane.xlu0 %43
    %v45 = vsub.f32 %v34, %v44
    %vm46 = vcmask 7168
    %v47 = vsel %vm46, %v45, 0.0
    %48 = vadd.xlane.f32.xlu0 %v47
    %v49 = vpop.xlane.xlu0 %48
    %v50 = vrot.slane %v49, 4
    %v51 = vadd.f32 %v49, %v50
    %v52 = vrot.slane %v51, 2
    %v53 = vadd.f32 %v51, %v52
    %v54 = vrot.slane %v53, 1
    %v55 = vadd.f32 %v53, %v54
    %s56 = vtos %v55
    %s57 = smul.f32 %s56, 0.125
    %v58 = vld [vmem:[%s3] sm:$0xff]
    %v59 = vmul.f32 %v58, %v58
    %vm60 = vcmask 261120
    %v61 = vsel %vm60, %v59, 0.0
    %62 = vadd.xlane.f32.xlu0 %v61
    %v63 = vpop.xlane.xlu0 %62
    %v64 = vmax.f32 %v63, 1e-24
    %v65 = vrsqrt.pop %v64
    %v66 = vmul.f32 %v58, %v65
    %v67 = vpack.c.bf16 %v66, %v66
    %v69 = vsel %vm60, %v67, 0
    %71 = vmatprep.subr.bf16.mxu0 0
    %72 = vmatpush1.bf16.xpose.msra.mxu0 0
    %73 = vmatprep.subr.bf16.mxu0 0
    %74 = vmatpush1.bf16.xpose.msra.mxu0 0
    %75 = vmatprep.subr.bf16.mxu0 0
    %76 = vmatpush1.bf16.xpose.msra.mxu0 0
    %77 = vmatprep.subr.bf16.mxu0 0
    %78 = vmatpush1.bf16.xpose.msra.mxu0 0
    %79 = vmatprep.subr.bf16.mxu0 0
    %80 = vmatpush1.bf16.xpose.msra.mxu0 0
    %81 = vmatprep.subr.bf16.mxu0 0
    %82 = vmatpush1.bf16.xpose.msra.mxu0 0
    %83 = vmatprep.subr.bf16.mxu0 0
    %84 = vmatpush1.bf16.xpose.msra.mxu0 0
    %85 = vmatprep.subr.bf16.mxu0 0
    %86 = vmatpush1.bf16.xpose.msra.mxu0 %v69
    %87 = vmatprep.subr.bf16.mxu0 0
    %88 = vmatpush2.bf16.xpose.msra.mxu0 0
    %89 = vmatprep.subr.bf16.mxu0 0
    %90 = vmatpush2.bf16.xpose.msra.mxu0 0
    %91 = vmatprep.subr.bf16.mxu0 0
    %92 = vmatpush2.bf16.xpose.msra.mxu0 0
    %93 = vmatprep.subr.bf16.mxu0 0
    %94 = vmatpush2.bf16.xpose.msra.mxu0 0
    %95 = vmatprep.subr.bf16.mxu0 0
    %96 = vmatpush2.bf16.xpose.msra.mxu0 0
    %97 = vmatprep.subr.bf16.mxu0 0
    %98 = vmatpush2.bf16.xpose.msra.mxu0 0
    %99 = vmatprep.subr.bf16.mxu0 0
    %100 = vmatpush2.bf16.xpose.msra.mxu0 0
    %101 = vmatprep.subr.bf16.mxu0 0
    %102 = vmatpush2.bf16.xpose.msra.mxu0 0
    %103 = vmatprep.mubr.bf16.mxu0 0
    %104 = vmatmul.mubr.bf16.gmra.mxu0 %v69
    %v105 = vpop.f32.mrf.mxu0
    %v106 = vadd.f32 0.0, %v105
    %v107 = vpop.f32.mrf.mxu0
    %v108 = vpop.f32.mrf.mxu0
    %v109 = vpop.f32.mrf.mxu0
    %110 = vdwg.mxu0
    %v111 = vmul.f32 %v65, %v65
    %v112 = vmul.f32 %v63, %v111
    %v113 = vmul.f32 %v66, %v66
    %v115 = vsel %vm60, 1.0, 0
    %v118 = vsel %vm60, %v113, 0
    %120 = vmatprep.subr.mxu0 0.0
    %121 = vmatpush1.xpose.msra.mxu0 0.0
    %122 = vmatprep.subr.mxu0 0.0
    %123 = vmatpush1.xpose.msra.mxu0 0.0
    %124 = vmatprep.subr.mxu0 0.0
    %125 = vmatpush1.xpose.msra.mxu0 0.0
    %126 = vmatprep.subr.mxu0 0.0
    %127 = vmatpush1.xpose.msra.mxu0 0.0
    %128 = vmatprep.subr.mxu0 0.0
    %129 = vmatpush1.xpose.msra.mxu0 0.0
    %130 = vmatprep.subr.mxu0 0.0
    %131 = vmatpush1.xpose.msra.mxu0 0.0
    %132 = vmatprep.subr.mxu0 0.0
    %133 = vmatpush1.xpose.msra.mxu0 0.0
    %134 = vmatprep.subr.mxu0 0.0
    %135 = vmatpush1.xpose.msra.mxu0 0.0
    %136 = vmatprep.subr.mxu0 0.0
    %137 = vmatpush1.xpose.msra.mxu0 0.0
    %138 = vmatprep.subr.mxu0 0.0
    %139 = vmatpush1.xpose.msra.mxu0 0.0
    %140 = vmatprep.subr.mxu0 0.0
    %141 = vmatpush1.xpose.msra.mxu0 0.0
    %142 = vmatprep.subr.mxu0 0.0
    %143 = vmatpush1.xpose.msra.mxu0 0.0
    %144 = vmatprep.subr.mxu0 0.0
    %145 = vmatpush1.xpose.msra.mxu0 0.0
    %146 = vmatprep.subr.mxu0 0.0
    %147 = vmatpush1.xpose.msra.mxu0 0.0
    %148 = vmatprep.subr.mxu0 0.0
    %149 = vmatpush1.xpose.msra.mxu0 0.0
    %150 = vmatprep.subr.mxu0 0.0
    %151 = vmatpush1.xpose.msra.mxu0 %v118
    %152 = vmatprep.subr.mxu0 0.0
    %153 = vmatpush2.xpose.msra.mxu0 0.0
    %154 = vmatprep.subr.mxu0 0.0
    %155 = vmatpush2.xpose.msra.mxu0 0.0
    %156 = vmatprep.subr.mxu0 0.0
    %157 = vmatpush2.xpose.msra.mxu0 0.0
    %158 = vmatprep.subr.mxu0 0.0
    %159 = vmatpush2.xpose.msra.mxu0 0.0
    %160 = vmatprep.subr.mxu0 0.0
    %161 = vmatpush2.xpose.msra.mxu0 0.0
    %162 = vmatprep.subr.mxu0 0.0
    %163 = vmatpush2.xpose.msra.mxu0 0.0
    %164 = vmatprep.subr.mxu0 0.0
    %165 = vmatpush2.xpose.msra.mxu0 0.0
    %166 = vmatprep.subr.mxu0 0.0
    %167 = vmatpush2.xpose.msra.mxu0 0.0
    %168 = vmatprep.subr.mxu0 0.0
    %169 = vmatpush2.xpose.msra.mxu0 0.0
    %170 = vmatprep.subr.mxu0 0.0
    %171 = vmatpush2.xpose.msra.mxu0 0.0
    %172 = vmatprep.subr.mxu0 0.0
    %173 = vmatpush2.xpose.msra.mxu0 0.0
    %174 = vmatprep.subr.mxu0 0.0
    %175 = vmatpush2.xpose.msra.mxu0 0.0
    %176 = vmatprep.subr.mxu0 0.0
    %177 = vmatpush2.xpose.msra.mxu0 0.0
    %178 = vmatprep.subr.mxu0 0.0
    %179 = vmatpush2.xpose.msra.mxu0 0.0
    %180 = vmatprep.subr.mxu0 0.0
    %181 = vmatpush2.xpose.msra.mxu0 0.0
    %182 = vmatprep.subr.mxu0 0.0
    %183 = vmatpush2.xpose.msra.mxu0 0.0
    %184 = vmatprep.mubr.f32.mxu0 0.0
    %185 = vmatmul.mubr.f32.gmra.mxu0 %v115
    %v186 = vpop.f32.mrf.mxu0
    %v187 = vadd.f32 0.0, %v186
    %v188 = vpop.f32.mrf.mxu0
    %189 = vdwg.mxu0
    %v190 = vlaneseq
    %v191 = vshrl.u32 %v190, 7
    %vm192 = vcmp.ne.s32.totalorder %v191, %v36
    %v193 = vmul.f32 %v106, 2.0
    %v194 = vsub.f32 %v112, %v193
    %v195 = vlaneseq
    %v196 = vshrl.u32 %v195, 7
    %v197 = vsub.s32 0, %v196
    %v198 = vrot.slane %v187, %v197
    %v199 = vadd.f32 %v194, %v198
    %v200 = vmax.f32 %v199, 0.0
    %v201 = vsel %vm192, %v200, 0.0
    %vm202 = vcmp.eq.f32.partialorder %v201, 0.0
    %v203 = vsel %vm202, 1e-16, %v201
    %v204 = vrsqrt.pop %v203
    %v205 = vmul.f32 %v203, %v204
    %vm206 = vcmp.eq.f32.partialorder %v203, inf
    %v207 = vsel %vm206, %v203, %v205
    %vm208 = vcmp.eq.f32.partialorder %v203, 0.0
    %v209 = vand.u32 %v203, 2147483648
    %v210 = vsel %vm208, %v209, %v207
    %v211 = vsel %vm202, 0.0, %v210
    %v212 = vlaneseq
    %v213 = vshrl.u32 %v212, 7
    %v214 = vsub.s32 0, %v213
    %v215 = vrot.slane %v21, %v214
    %vm216 = vcmp.eq.s32.totalorder %v39, %v215
    %vm217 = vmand %vm216, %vm192
    %v218 = vsel %vm217, %v211, 0.0
    %vm219 = vcmask 64512
    %v220 = vsel %vm219, %v218, -inf
    %221 = vmax.xlane.f32.xlu0 %v220
    %v222 = vpop.xlane.xlu0 %221
    %v223 = vsel %vm219, %v211, -inf
    %224 = vmax.xlane.f32.xlu0 %v223
    %v225 = vpop.xlane.xlu0 %224
    %v226 = vadd.f32 %v211, %v225
    %v227 = vsel %vm216, %v226, %v211
    %v228 = vsel %vm219, %v227, inf
    %229 = vmin.xlane.f32.xlu0 %v228
    %v230 = vpop.xlane.xlu0 %229
    %v231 = vsub.f32 %v222, %v230
    %v232 = vadd.f32 %v231, 1.0
    %v233 = vmax.f32 %v232, 0.0
    %v234 = vsel %vm46, %v233, 0.0
    %235 = vadd.xlane.f32.xlu0 %v234
    %v236 = vpop.xlane.xlu0 %235
    %v237 = vrot.slane %v236, 4
    %v238 = vadd.f32 %v236, %v237
    %v239 = vrot.slane %v238, 2
    %v240 = vadd.f32 %v238, %v239
    %v241 = vrot.slane %v240, 1
    %v242 = vadd.f32 %v240, %v241
    %s243 = vtos %v242
    %s244 = smul.f32 %s243, 0.125
    %s245 = smul.f32 %s57, 0.5
    %s246 = smul.f32 %s244, 0.5
    %s247 = sadd.f32 %s245, %s246
    %s248 = scalar_lea.smem [#allocation2], 0
    %249 = sst [smem:[%s248]] %s247
    %s250 = scalar_lea.smem [#allocation2], 1
    %251 = sst [smem:[%s250]] %s245
    %s252 = scalar_lea.smem [#allocation2], 2
    %253 = sst [smem:[%s252]] %s246
    // Predicated region
    $region18: #{tpu_custom_call.1} parent=1 // pred_check
      _
    $region19: #{tpu_custom_call.1} parent=1 // pred_check_branch
      %255 = sbr.rel (0) target = $region21
    $region20: #{tpu_custom_call.1} parent=1 // pred_region
      %s257 = ssub.s32 16, 16
      %258 = vsyncadd [#allocation3], %s257
      %261 = dma.smem_to_hbm [#allocation2], 16, %s4, [#allocation3]
    $region21: #{tpu_custom_call.1} parent=1 // pred_fallthru
      _
    // Predicated region
    $region22: #{tpu_custom_call.1} parent=1 // pred_check
      _
    $region23: #{tpu_custom_call.1} parent=1 // pred_check_branch
      %263 = sbr.rel (0) target = $region25
    $region24: #{tpu_custom_call.1} parent=1 // pred_region
      %264 = dma.done [#allocation3], 16
    $region25: #{tpu_custom_call.1} parent=1 // pred_fallthru
      _
    %265 = sfence
    %266 = vsyncpa [#allocation3], 1

</llo_original>
